<compile_context>
chip_gen: v7x
topology: tpu7x:2x2x1
jax: 0.10.0
libtpu: 0.0.40
codegen_flags: <defaults>
</compile_context>

<pallas_src>
import jax
import jax.numpy as jnp
from jax.experimental import pallas as pl
from jax.experimental.pallas import tpu as pltpu

HIDDEN = 32        # hp.hidden
NEG_BIG = -1e30    # bias value for padded output lanes -> exp() underflows to 0


def _round_up(n, m):
    return ((n + m - 1) // m) * m


def actor_mlp_kernel(x_ref, w1_ref, b1_ref, w2_ref, b2_ref, w3_ref, b3_ref,
                     out_ref):
    x = x_ref[...]                                               # (TM, num_input)
    h1 = jnp.tanh(
        jnp.dot(x, w1_ref[...], preferred_element_type=jnp.float32) + b1_ref[...]
    )                                                            # (TM, HIDDEN)
    h2 = jnp.tanh(
        jnp.dot(h1, w2_ref[...], preferred_element_type=jnp.float32) + b2_ref[...]
    )                                                            # (TM, HIDDEN)
    logits = (
        jnp.dot(h2, w3_ref[...], preferred_element_type=jnp.float32) + b3_ref[...]
    )                                                            # (TM, OUT_PAD)

    # Softmax over the feature axis.  Padded lanes carry NEG_BIG bias, so
    # exp(logit - m) == 0 there and they drop out of the sum.
    m = jnp.max(logits, axis=-1, keepdims=True)
    e = jnp.exp(logits - m)
    denom = jnp.sum(e, axis=-1, keepdims=True)
    r = pl.reciprocal(denom, approx=True)        # EUP vrcp (free slot)
    r = r * (2.0 - denom * r)                    # one Newton step -> ~f32 exact
    probs = e * r

    # Single lane-dense output slab: [0] = logits, [1] = probs.
    out_ref[0, :, :] = logits
    out_ref[1, :, :] = probs


def init_params(key, num_input, num_output, hidden=HIDDEN):
    """Deterministic init mirroring nn.Linear defaults + the fc3 scaling."""
    ks = jax.random.split(key, 6)

    def lin(kw, kb, fan_in, fan_out):
        bound = 1.0 / (fan_in ** 0.5)
        w = jax.random.uniform(kw, (fan_in, fan_out), jnp.float32, -bound, bound)
        b = jax.random.uniform(kb, (1, fan_out), jnp.float32, -bound, bound)
        return w, b

    w1, b1 = lin(ks[0], ks[1], num_input, hidden)
    w2, b2 = lin(ks[2], ks[3], hidden, hidden)
    w3, b3 = lin(ks[4], ks[5], hidden, num_output)
    w3 = w3 * 0.1          # self.fc3.weight.data.mul_(0.1)
    b3 = b3 * 0.0          # self.fc3.bias.data.mul_(0.0)
    return (w1, b1, w2, b2, w3, b3)


def prepare_params(params):
    """Pad fc3 to a lane-dense (hidden, OUT_PAD) block; padded bias lanes = NEG_BIG."""
    w1, b1, w2, b2, w3, b3 = params
    num_output = w3.shape[1]
    out_pad = _round_up(num_output, 128)
    w3p = jnp.zeros((w3.shape[0], out_pad), jnp.float32).at[:, :num_output].set(w3)
    b3p = jnp.full((1, out_pad), NEG_BIG, jnp.float32).at[:, :num_output].set(b3)
    return (w1, b1, w2, b2, w3p, b3p), num_output


def _run_mlp(x2d, params, m_tile=None):
    """Run the fused MLP kernel on a (M, num_input) batch of flattened states."""
    (w1, b1, w2, b2, w3p, b3p), num_output = prepare_params(params)
    m, num_input = x2d.shape
    hidden = w1.shape[1]
    out_pad = w3p.shape[1]

    # Pad the batch to a sublane multiple and pick the batch tile (<= 512 rows;
    # this MLP is tiny, so bigger tiles just amortize per-grid-step overhead).
    m_pad = _round_up(max(m, 1), 8)
    if m_tile is None:
        m_tile = min(m_pad, 512)
    m_tile = _round_up(m_tile, 8)
    m_pad = _round_up(m_pad, m_tile)
    if m_pad != m:
        x2d = jnp.pad(x2d, ((0, m_pad - m), (0, 0)))

    grid = (m_pad // m_tile,)
    out = pl.pallas_call(
        actor_mlp_kernel,
        out_shape=jax.ShapeDtypeStruct((2, m_pad, out_pad), jnp.float32),
        grid=grid,
        in_specs=[
            pl.BlockSpec((m_tile, num_input), lambda i: (i, 0)),   # x tile
            pl.BlockSpec((num_input, hidden), lambda i: (0, 0)),   # w1 (VMEM-resident)
            pl.BlockSpec((1, hidden), lambda i: (0, 0)),           # b1
            pl.BlockSpec((hidden, hidden), lambda i: (0, 0)),      # w2
            pl.BlockSpec((1, hidden), lambda i: (0, 0)),           # b2
            pl.BlockSpec((hidden, out_pad), lambda i: (0, 0)),     # w3 (padded)
            pl.BlockSpec((1, out_pad), lambda i: (0, 0)),          # b3 (padded)
        ],
        out_specs=pl.BlockSpec((2, m_tile, out_pad), lambda i: (0, i, 0)),
        compiler_params=pltpu.CompilerParams(
            dimension_semantics=("parallel",)),                    # v7x: 2 TCs split batch
    )(x2d, w1, b1, w2, b2, w3p, b3p)

    logits = out[0, :m, :num_output]
    probs = out[1, :m, :num_output]
    return logits, probs


def actor_linear_forward(x, params):
    """ActorLinear.forward for a single 2-D state (module semantics: x.view(-1))."""
    if x.ndim == 2:
        xr = x.reshape(1, -1).astype(jnp.float32)   # x.view(-1) as a row vector
    else:
        # TODO(synk): 4-D input path (x.view(B, C, -1) + F.softmax's legacy
        # implicit-dim behavior over a 3-D tensor) is not implemented.
        raise NotImplementedError("only the 2-D input path is implemented")
    logits, probs = _run_mlp(xr, params)
    # PyTorch returns 1-D tensors of length num_output for the 2-D input path.
    return logits.reshape(-1), probs.reshape(-1)


def actor_linear_forward_batch(states, params, m_tile=None):
    """Many independent 2-D states in ONE pallas_call (amortizes launch + weight DMA).

    states: (T, ...) where each states[t] is one module input (flattened like
    x.view(-1)).  Returns (T, num_output) logits and probs.
    """
    t = states.shape[0]
    x2d = states.reshape(t, -1).astype(jnp.float32)
    return _run_mlp(x2d, params, m_tile=m_tile)


def actor_linear_reference(x, params):
    """Pure-JAX reference of the single-state forward pass."""
    w1, b1, w2, b2, w3, b3 = params
    v = x.reshape(1, -1).astype(jnp.float32)
    h1 = jnp.tanh(v @ w1 + b1)
    h2 = jnp.tanh(h1 @ w2 + b2)
    logits = h2 @ w3 + b3
    probs = jax.nn.softmax(logits, axis=-1)
    return logits.reshape(-1), probs.reshape(-1)


if __name__ == "__main__":
    key = jax.random.PRNGKey(0)
    kx, kp, ks = jax.random.split(key, 3)

    # Small deeprm-style state: (batch=2, features=64) -> flattened num_input=128
    x = jax.random.normal(kx, (2, 64), dtype=jnp.float32)
    num_input = x.size
    num_output = 8
    params = init_params(kp, num_input, num_output, hidden=HIDDEN)

    # ---- Single-state path (exact module semantics) ----
    logits, probs = actor_linear_forward(x, params)
    logits = jax.block_until_ready(logits)
    probs = jax.block_until_ready(probs)

    ref_logits, ref_probs = actor_linear_reference(x, params)
    assert logits.shape == (num_output,) and probs.shape == (num_output,)
    assert jnp.allclose(logits, ref_logits, atol=1e-5, rtol=1e-5)
    assert jnp.allclose(probs, ref_probs, atol=1e-5, rtol=1e-5)
    assert jnp.allclose(jnp.sum(probs), 1.0, atol=1e-5)

    # ---- Batched rollout path (default tile: whole batch in one grid step) ----
    states = jax.random.normal(ks, (20, 2, 64), dtype=jnp.float32)
    blogits, bprobs = actor_linear_forward_batch(states, params)
    blogits = jax.block_until_ready(blogits)
    bprobs = jax.block_until_ready(bprobs)
    assert blogits.shape == (20, num_output) and bprobs.shape == (20, num_output)
    for t in range(states.shape[0]):
        rl, rp = actor_linear_reference(states[t], params)
        assert jnp.allclose(blogits[t], rl, atol=1e-5, rtol=1e-5)
        assert jnp.allclose(bprobs[t], rp, atol=1e-5, rtol=1e-5)
    assert jnp.allclose(jnp.sum(bprobs, axis=-1), 1.0, atol=1e-5)

    # ---- Batched rollout path with a small tile (exercises grid > 1) ----
    blogits2, bprobs2 = actor_linear_forward_batch(states, params, m_tile=8)
    blogits2 = jax.block_until_ready(blogits2)
    bprobs2 = jax.block_until_ready(bprobs2)
    assert jnp.allclose(blogits2, blogits, atol=1e-5, rtol=1e-5)
    assert jnp.allclose(bprobs2, bprobs, atol=1e-5, rtol=1e-5)

    print("KERNEL_OK")
</pallas_src>

<mosaic_0001>
module attributes {stable_mosaic.version = 11 : i64} {
  func.func @actor_mlp_kernel(%arg0: i32, %arg1: memref<8x128xf32, #tpu.memory_space<vmem>>, %arg2: memref<128x32xf32, #tpu.memory_space<vmem>>, %arg3: memref<1x32xf32, #tpu.memory_space<vmem>>, %arg4: memref<32x32xf32, #tpu.memory_space<vmem>>, %arg5: memref<1x32xf32, #tpu.memory_space<vmem>>, %arg6: memref<32x128xf32, #tpu.memory_space<vmem>>, %arg7: memref<1x128xf32, #tpu.memory_space<vmem>>, %arg8: memref<2x8x128xf32, #tpu.memory_space<vmem>>) attributes {dimension_semantics = [#tpu.dimension_semantics<parallel>], iteration_bounds = array<i64: 1>, scalar_prefetch = 0 : i64, scratch_operands = 0 : i64, tpu.core_type = #tpu.core_type<tc>, window_params = [{transform_indices = @transform_0, window_bounds = array<i64: 8, 128>}, {pipeline_mode = #tpu.pipeline_mode<synchronous>, transform_indices = @transform_1, window_bounds = array<i64: 128, 32>}, {pipeline_mode = #tpu.pipeline_mode<synchronous>, transform_indices = @transform_2, window_bounds = array<i64: 1, 32>}, {pipeline_mode = #tpu.pipeline_mode<synchronous>, transform_indices = @transform_3, window_bounds = array<i64: 32, 32>}, {pipeline_mode = #tpu.pipeline_mode<synchronous>, transform_indices = @transform_4, window_bounds = array<i64: 1, 32>}, {pipeline_mode = #tpu.pipeline_mode<synchronous>, transform_indices = @transform_5, window_bounds = array<i64: 32, 128>}, {pipeline_mode = #tpu.pipeline_mode<synchronous>, transform_indices = @transform_6, window_bounds = array<i64: 1, 128>}, {transform_indices = @transform_7, window_bounds = array<i64: 2, 8, 128>}]} {
    %c0 = arith.constant 0 : index
    %c0_0 = arith.constant 0 : index
    %0 = vector.load %arg1[%c0, %c0_0] : memref<8x128xf32, #tpu.memory_space<vmem>>, vector<8x128xf32>
    %c0_1 = arith.constant 0 : index
    %c0_2 = arith.constant 0 : index
    %1 = vector.load %arg2[%c0_1, %c0_2] : memref<128x32xf32, #tpu.memory_space<vmem>>, vector<128x32xf32>
    %cst = arith.constant dense<0.000000e+00> : vector<8x32xf32>
    %2 = tpu.matmul %0, %1, %cst {dimension_numbers = #tpu.dot_dimension_numbers<[1], [0], [0], [1], [0, 0, 1, 1], [], []>} : vector<8x128xf32>, vector<128x32xf32>, vector<8x32xf32> -> vector<8x32xf32>
    %c0_3 = arith.constant 0 : index
    %c0_4 = arith.constant 0 : index
    %3 = vector.load %arg3[%c0_3, %c0_4] : memref<1x32xf32, #tpu.memory_space<vmem>>, vector<1x32xf32>
    %4 = vector.broadcast %3 : vector<1x32xf32> to vector<8x32xf32>
    %5 = arith.addf %2, %4 : vector<8x32xf32>
    %6 = math.tanh %5 : vector<8x32xf32>
    %c0_5 = arith.constant 0 : index
    %c0_6 = arith.constant 0 : index
    %7 = vector.load %arg4[%c0_5, %c0_6] : memref<32x32xf32, #tpu.memory_space<vmem>>, vector<32x32xf32>
    %cst_7 = arith.constant dense<0.000000e+00> : vector<8x32xf32>
    %8 = tpu.matmul %6, %7, %cst_7 {dimension_numbers = #tpu.dot_dimension_numbers<[1], [0], [0], [1], [0, 0, 1, 1], [], []>} : vector<8x32xf32>, vector<32x32xf32>, vector<8x32xf32> -> vector<8x32xf32>
    %c0_8 = arith.constant 0 : index
    %c0_9 = arith.constant 0 : index
    %9 = vector.load %arg5[%c0_8, %c0_9] : memref<1x32xf32, #tpu.memory_space<vmem>>, vector<1x32xf32>
    %10 = vector.broadcast %9 : vector<1x32xf32> to vector<8x32xf32>
    %11 = arith.addf %8, %10 : vector<8x32xf32>
    %12 = math.tanh %11 : vector<8x32xf32>
    %c0_10 = arith.constant 0 : index
    %c0_11 = arith.constant 0 : index
    %13 = vector.load %arg6[%c0_10, %c0_11] : memref<32x128xf32, #tpu.memory_space<vmem>>, vector<32x128xf32>
    %cst_12 = arith.constant dense<0.000000e+00> : vector<8x128xf32>
    %14 = tpu.matmul %12, %13, %cst_12 {dimension_numbers = #tpu.dot_dimension_numbers<[1], [0], [0], [1], [0, 0, 1, 1], [], []>} : vector<8x32xf32>, vector<32x128xf32>, vector<8x128xf32> -> vector<8x128xf32>
    %c0_13 = arith.constant 0 : index
    %c0_14 = arith.constant 0 : index
    %15 = vector.load %arg7[%c0_13, %c0_14] : memref<1x128xf32, #tpu.memory_space<vmem>>, vector<1x128xf32>
    %16 = vector.broadcast %15 : vector<1x128xf32> to vector<8x128xf32>
    %17 = arith.addf %14, %16 : vector<8x128xf32>
    %cst_15 = arith.constant dense<0xFF800000> : vector<8xf32>
    %18 = vector.multi_reduction <maximumf>, %17, %cst_15 [1] : vector<8x128xf32> to vector<8xf32>
    %19 = vector.shape_cast %18 : vector<8xf32> to vector<8x1xf32>
    %20 = vector.broadcast %19 : vector<8x1xf32> to vector<8x128xf32>
    %21 = arith.subf %17, %20 : vector<8x128xf32>
    %22 = math.exp %21 : vector<8x128xf32>
    %cst_16 = arith.constant dense<0.000000e+00> : vector<8xf32>
    %23 = vector.multi_reduction <add>, %22, %cst_16 [1] : vector<8x128xf32> to vector<8xf32>
    %24 = vector.shape_cast %23 : vector<8xf32> to vector<8x1xf32>
    %25 = tpu.reciprocal %24 {approx = true} : vector<8x1xf32> -> vector<8x1xf32>
    %26 = arith.mulf %24, %25 : vector<8x1xf32>
    %cst_17 = arith.constant 2.000000e+00 : f32
    %27 = vector.broadcast %cst_17 : f32 to vector<8x1xf32>
    %28 = arith.subf %27, %26 : vector<8x1xf32>
    %29 = arith.mulf %25, %28 : vector<8x1xf32>
    %30 = vector.broadcast %29 : vector<8x1xf32> to vector<8x128xf32>
    %31 = arith.mulf %22, %30 : vector<8x128xf32>
    %c0_18 = arith.constant 0 : index
    %c0_19 = arith.constant 0 : index
    %c0_20 = arith.constant 0 : index
    %32 = vector.load %arg8[%c0_18, %c0_19, %c0_20] : memref<2x8x128xf32, #tpu.memory_space<vmem>>, vector<1x8x128xf32>
    %33 = vector.shape_cast %32 : vector<1x8x128xf32> to vector<8x128xf32>
    %34 = vector.shape_cast %17 : vector<8x128xf32> to vector<1x8x128xf32>
    tpu.vector_store %arg8[%c0_18, %c0_19, %c0_20], %34 {strides = array<i32>} : memref<2x8x128xf32, #tpu.memory_space<vmem>>, vector<1x8x128xf32>,
    %c1 = arith.constant 1 : index
    %c0_21 = arith.constant 0 : index
    %c0_22 = arith.constant 0 : index
    %35 = vector.load %arg8[%c1, %c0_21, %c0_22] : memref<2x8x128xf32, #tpu.memory_space<vmem>>, vector<1x8x128xf32>
    %36 = vector.shape_cast %35 : vector<1x8x128xf32> to vector<8x128xf32>
    %37 = vector.shape_cast %31 : vector<8x128xf32> to vector<1x8x128xf32>
    tpu.vector_store %arg8[%c1, %c0_21, %c0_22], %37 {strides = array<i32>} : memref<2x8x128xf32, #tpu.memory_space<vmem>>, vector<1x8x128xf32>,
    return
  }
  func.func @transform_0(%arg0: i32) -> (i32, i32) {
    %c0_i32 = arith.constant 0 : i32
    %c0_i32_0 = arith.constant 0 : i32
    return %arg0, %c0_i32 : i32, i32
  }
  func.func @transform_1(%arg0: i32) -> (i32, i32) {
    %c0_i32 = arith.constant 0 : i32
    %c0_i32_0 = arith.constant 0 : i32
    %c0_i32_1 = arith.constant 0 : i32
    return %c0_i32, %c0_i32_0 : i32, i32
  }
  func.func @transform_2(%arg0: i32) -> (i32, i32) {
    %c0_i32 = arith.constant 0 : i32
    %c0_i32_0 = arith.constant 0 : i32
    %c0_i32_1 = arith.constant 0 : i32
    return %c0_i32, %c0_i32_0 : i32, i32
  }
  func.func @transform_3(%arg0: i32) -> (i32, i32) {
    %c0_i32 = arith.constant 0 : i32
    %c0_i32_0 = arith.constant 0 : i32
    %c0_i32_1 = arith.constant 0 : i32
    return %c0_i32, %c0_i32_0 : i32, i32
  }
  func.func @transform_4(%arg0: i32) -> (i32, i32) {
    %c0_i32 = arith.constant 0 : i32
    %c0_i32_0 = arith.constant 0 : i32
    %c0_i32_1 = arith.constant 0 : i32
    return %c0_i32, %c0_i32_0 : i32, i32
  }
  func.func @transform_5(%arg0: i32) -> (i32, i32) {
    %c0_i32 = arith.constant 0 : i32
    %c0_i32_0 = arith.constant 0 : i32
    %c0_i32_1 = arith.constant 0 : i32
    return %c0_i32, %c0_i32_0 : i32, i32
  }
  func.func @transform_6(%arg0: i32) -> (i32, i32) {
    %c0_i32 = arith.constant 0 : i32
    %c0_i32_0 = arith.constant 0 : i32
    %c0_i32_1 = arith.constant 0 : i32
    return %c0_i32, %c0_i32_0 : i32, i32
  }
  func.func @transform_7(%arg0: i32) -> (i32, i32, i32) {
    %c0_i32 = arith.constant 0 : i32
    %c0_i32_0 = arith.constant 0 : i32
    %c0_i32_1 = arith.constant 0 : i32
    return %c0_i32, %arg0, %c0_i32_0 : i32, i32, i32
  }
}

</mosaic_0001>

<llo_original>
// kernel: tpu_custom_call.1
$region0: #{tpu_custom_call.1}
  #allocation0 [shape = 'u32[]', space=smem, size = 0x4, offset = 0x4, fixed_abs, tag = 'smem constant byte address 0x4 - core index']
  #allocation1 [shape = 'u32[144,128]{1,0:T(1,128)}', space=vmem, size = 0x12000, scoped, tag = 'internal scratch']
  %s0 = inlined_call_operand.vmem [shape: f32[8,128], index: 0, kind: input, shape index: {}]
  %s1 = inlined_call_operand.vmem [shape: f32[128,32], index: 1, kind: input, shape index: {}]
  %s2 = inlined_call_operand.vmem [shape: f32[1,32], index: 2, kind: input, shape index: {}]
  %s3 = inlined_call_operand.vmem [shape: f32[32,32], index: 3, kind: input, shape index: {}]
  %s4 = inlined_call_operand.vmem [shape: f32[1,32], index: 4, kind: input, shape index: {}]
  %s5 = inlined_call_operand.vmem [shape: f32[32,128], index: 5, kind: input, shape index: {}]
  %s6 = inlined_call_operand.vmem [shape: f32[1,128], index: 6, kind: input, shape index: {}]
  %s7 = inlined_call_operand.hbm [shape: f32[2,8,128], index: 7, kind: output, shape index: {}]
  %s8 = sld [smem:[#allocation0]]
  $region38: #{tpu_custom_call.1} parent=0
    _
  %s10 = ssub.s32 1, %s8
  %s11 = scalar_select 0, %s10, %s8
  $region1: #{tpu_custom_call.1} parent=0
    #allocation2 [shape = 'u8[8192]{0}', space=vmem, size = 0x2000, scoped, tag = 'output window, operand 0, single buffered']
    #allocation3 [shape = 's32[1]{0}', space=sflag, size = 0x4, scoped, tag = 'scoped memory for tpu_custom_call.1']
    %12 = vsyncpa [#allocation3], 0
    // Predicated region
    $region2: #{tpu_custom_call.1} parent=1 // pred_check
      _
    $region3: #{tpu_custom_call.1} parent=1 // pred_check_branch
      %14 = sbr.rel (0) target = $region5
    $region4: #{tpu_custom_call.1} parent=1 // pred_region
      _
    $region5: #{tpu_custom_call.1} parent=1 // pred_fallthru
      _
    // Predicated region
    $region6: #{tpu_custom_call.1} parent=1 // pred_check
      _
    $region7: #{tpu_custom_call.1} parent=1 // pred_check_branch
      %16 = sbr.rel (0) target = $region9
    $region8: #{tpu_custom_call.1} parent=1 // pred_region
      _
    $region9: #{tpu_custom_call.1} parent=1 // pred_fallthru
      _
    // Predicated region
    $region10: #{tpu_custom_call.1} parent=1 // pred_check
      _
    $region11: #{tpu_custom_call.1} parent=1 // pred_check_branch
      %18 = sbr.rel (0) target = $region13
    $region12: #{tpu_custom_call.1} parent=1 // pred_region
      _
    $region13: #{tpu_custom_call.1} parent=1 // pred_fallthru
      _
    // Predicated region
    $region14: #{tpu_custom_call.1} parent=1 // pred_check
      _
    $region15: #{tpu_custom_call.1} parent=1 // pred_check_branch
      %20 = sbr.rel (0) target = $region17
    $region16: #{tpu_custom_call.1} parent=1 // pred_region
      _
    $region17: #{tpu_custom_call.1} parent=1 // pred_fallthru
      _
    // Predicated region
    $region18: #{tpu_custom_call.1} parent=1 // pred_check
      _
    $region19: #{tpu_custom_call.1} parent=1 // pred_check_branch
      %22 = sbr.rel (0) target = $region21
    $region20: #{tpu_custom_call.1} parent=1 // pred_region
      _
    $region21: #{tpu_custom_call.1} parent=1 // pred_fallthru
      _
    // Predicated region
    $region22: #{tpu_custom_call.1} parent=1 // pred_check
      _
    $region23: #{tpu_custom_call.1} parent=1 // pred_check_branch
      %24 = sbr.rel (0) target = $region25
    $region24: #{tpu_custom_call.1} parent=1 // pred_region
      _
    $region25: #{tpu_custom_call.1} parent=1 // pred_fallthru
      _
    // Predicated region
    $region26: #{tpu_custom_call.1} parent=1 // pred_check
      _
    $region27: #{tpu_custom_call.1} parent=1 // pred_check_branch
      %26 = sbr.rel (0) target = $region29
    $region28: #{tpu_custom_call.1} parent=1 // pred_region
      _
    $region29: #{tpu_custom_call.1} parent=1 // pred_fallthru
      _
    %v27 = vld [vmem:[%s0] sm:$0xff]
    %v28 = vld [vmem:[%s1] sm:$0xff]
    %v29 = vld [vmem:[%s1 + $0x8] sm:$0xff]
    %v30 = vld [vmem:[%s1 + $0x10] sm:$0xff]
    %v31 = vld [vmem:[%s1 + $0x18] sm:$0xff]
    %v32 = vld [vmem:[%s1 + $0x20] sm:$0xff]
    %v33 = vld [vmem:[%s1 + $0x28] sm:$0xff]
    %v34 = vld [vmem:[%s1 + $0x30] sm:$0xff]
    %v35 = vld [vmem:[%s1 + $0x38] sm:$0xff]
    %v36 = vld [vmem:[%s1 + $0x40] sm:$0xff]
    %v37 = vld [vmem:[%s1 + $0x48] sm:$0xff]
    %v38 = vld [vmem:[%s1 + $0x50] sm:$0xff]
    %v39 = vld [vmem:[%s1 + $0x58] sm:$0xff]
    %v40 = vld [vmem:[%s1 + $0x60] sm:$0xff]
    %v41 = vld [vmem:[%s1 + $0x68] sm:$0xff]
    %v42 = vld [vmem:[%s1 + $0x70] sm:$0xff]
    %v43 = vld [vmem:[%s1 + $0x78] sm:$0xff]
    %v44 = vld [vmem:[%s2] sm:$0x1]
    %v46 = vlaneseq
    %v47 = vshrl.u32 %v46, 7
    %v48 = vsub.s32 0, %v47
    %v49 = vrot.slane %v44, %v48
    %51 = vmatprep.subr.mxu0 0.0
    %52 = vmatpush1.msra.mxu0 %v28
    %53 = vmatprep.subr.mxu0 0.0
    %54 = vmatpush1.msra.mxu0 %v29
    %55 = vmatprep.subr.mxu0 0.0
    %56 = vmatpush1.msra.mxu0 %v30
    %57 = vmatprep.subr.mxu0 0.0
    %58 = vmatpush1.msra.mxu0 %v31
    %59 = vmatprep.subr.mxu0 0.0
    %60 = vmatpush1.msra.mxu0 %v32
    %61 = vmatprep.subr.mxu0 0.0
    %62 = vmatpush1.msra.mxu0 %v33
    %63 = vmatprep.subr.mxu0 0.0
    %64 = vmatpush1.msra.mxu0 %v34
    %65 = vmatprep.subr.mxu0 0.0
    %66 = vmatpush1.msra.mxu0 %v35
    %67 = vmatprep.subr.mxu0 0.0
    %68 = vmatpush1.msra.mxu0 %v36
    %69 = vmatprep.subr.mxu0 0.0
    %70 = vmatpush1.msra.mxu0 %v37
    %71 = vmatprep.subr.mxu0 0.0
    %72 = vmatpush1.msra.mxu0 %v38
    %73 = vmatprep.subr.mxu0 0.0
    %74 = vmatpush1.msra.mxu0 %v39
    %75 = vmatprep.subr.mxu0 0.0
    %76 = vmatpush1.msra.mxu0 %v40
    %77 = vmatprep.subr.mxu0 0.0
    %78 = vmatpush1.msra.mxu0 %v41
    %79 = vmatprep.subr.mxu0 0.0
    %80 = vmatpush1.msra.mxu0 %v42
    %81 = vmatprep.subr.mxu0 0.0
    %82 = vmatpush1.msra.mxu0 %v43
    %83 = vmatprep.subr.mxu0 0.0
    %84 = vmatpush1.msra.mxu0 0.0
    %85 = vmatprep.subr.mxu0 0.0
    %86 = vmatpush1.msra.mxu0 0.0
    %87 = vmatprep.subr.mxu0 0.0
    %88 = vmatpush1.msra.mxu0 0.0
    %89 = vmatprep.subr.mxu0 0.0
    %90 = vmatpush1.msra.mxu0 0.0
    %91 = vmatprep.subr.mxu0 0.0
    %92 = vmatpush1.msra.mxu0 0.0
    %93 = vmatprep.subr.mxu0 0.0
    %94 = vmatpush1.msra.mxu0 0.0
    %95 = vmatprep.subr.mxu0 0.0
    %96 = vmatpush1.msra.mxu0 0.0
    %97 = vmatprep.subr.mxu0 0.0
    %98 = vmatpush1.msra.mxu0 0.0
    %99 = vmatprep.subr.mxu0 0.0
    %100 = vmatpush1.msra.mxu0 0.0
    %101 = vmatprep.subr.mxu0 0.0
    %102 = vmatpush1.msra.mxu0 0.0
    %103 = vmatprep.subr.mxu0 0.0
    %104 = vmatpush1.msra.mxu0 0.0
    %105 = vmatprep.subr.mxu0 0.0
    %106 = vmatpush1.msra.mxu0 0.0
    %107 = vmatprep.subr.mxu0 0.0
    %108 = vmatpush1.msra.mxu0 0.0
    %109 = vmatprep.subr.mxu0 0.0
    %110 = vmatpush1.msra.mxu0 0.0
    %111 = vmatprep.subr.mxu0 0.0
    %112 = vmatpush1.msra.mxu0 0.0
    %113 = vmatprep.subr.mxu0 0.0
    %114 = vmatpush1.msra.mxu0 0.0
    %115 = vmatprep.mubr.f32.mxu0 0.0
    %116 = vmatmul.mubr.f32.gmra.mrb[0].mxu0 %v27
    %v117 = vpop.f32.mrb[0].mxu0
    %v118 = vadd.f32 %v49, %v117
    %v119 = vpop.f32.mrb[0].mxu0
    %120 = vdwg.mxu0
    %v121 = vtanh.pop %v118
    %v122 = vld [vmem:[%s3] sm:$0xff]
    %v123 = vld [vmem:[%s3 + $0x8] sm:$0xff]
    %v124 = vld [vmem:[%s3 + $0x10] sm:$0xff]
    %v125 = vld [vmem:[%s3 + $0x18] sm:$0xff]
    %v126 = vld [vmem:[%s4] sm:$0x1]
    %v128 = vlaneseq
    %v129 = vshrl.u32 %v128, 7
    %v130 = vsub.s32 0, %v129
    %v131 = vrot.slane %v126, %v130
    %vm133 = vcmask 261120
    %v135 = vsel %vm133, %v121, 0
    %137 = vmatprep.subr.mxu0 0.0
    %138 = vmatpush1.msra.mxu0 %v122
    %139 = vmatprep.subr.mxu0 0.0
    %140 = vmatpush1.msra.mxu0 %v123
    %141 = vmatprep.subr.mxu0 0.0
    %142 = vmatpush1.msra.mxu0 %v124
    %143 = vmatprep.subr.mxu0 0.0
    %144 = vmatpush1.msra.mxu0 %v125
    %145 = vmatprep.subr.mxu0 0.0
    %146 = vmatpush1.msra.mxu0 0.0
    %147 = vmatprep.subr.mxu0 0.0
    %148 = vmatpush1.msra.mxu0 0.0
    %149 = vmatprep.subr.mxu0 0.0
    %150 = vmatpush1.msra.mxu0 0.0
    %151 = vmatprep.subr.mxu0 0.0
    %152 = vmatpush1.msra.mxu0 0.0
    %153 = vmatprep.subr.mxu0 0.0
    %154 = vmatpush1.msra.mxu0 0.0
    %155 = vmatprep.subr.mxu0 0.0
    %156 = vmatpush1.msra.mxu0 0.0
    %157 = vmatprep.subr.mxu0 0.0
    %158 = vmatpush1.msra.mxu0 0.0
    %159 = vmatprep.subr.mxu0 0.0
    %160 = vmatpush1.msra.mxu0 0.0
    %161 = vmatprep.subr.mxu0 0.0
    %162 = vmatpush1.msra.mxu0 0.0
    %163 = vmatprep.subr.mxu0 0.0
    %164 = vmatpush1.msra.mxu0 0.0
    %165 = vmatprep.subr.mxu0 0.0
    %166 = vmatpush1.msra.mxu0 0.0
    %167 = vmatprep.subr.mxu0 0.0
    %168 = vmatpush1.msra.mxu0 0.0
    %169 = vmatprep.subr.mxu0 0.0
    %170 = vmatpush1.msra.mxu0 0.0
    %171 = vmatprep.subr.mxu0 0.0
    %172 = vmatpush1.msra.mxu0 0.0
    %173 = vmatprep.subr.mxu0 0.0
    %174 = vmatpush1.msra.mxu0 0.0
    %175 = vmatprep.subr.mxu0 0.0
    %176 = vmatpush1.msra.mxu0 0.0
    %177 = vmatprep.subr.mxu0 0.0
    %178 = vmatpush1.msra.mxu0 0.0
    %179 = vmatprep.subr.mxu0 0.0
    %180 = vmatpush1.msra.mxu0 0.0
    %181 = vmatprep.subr.mxu0 0.0
    %182 = vmatpush1.msra.mxu0 0.0
    %183 = vmatprep.subr.mxu0 0.0
    %184 = vmatpush1.msra.mxu0 0.0
    %185 = vmatprep.subr.mxu0 0.0
    %186 = vmatpush1.msra.mxu0 0.0
    %187 = vmatprep.subr.mxu0 0.0
    %188 = vmatpush1.msra.mxu0 0.0
    %189 = vmatprep.subr.mxu0 0.0
    %190 = vmatpush1.msra.mxu0 0.0
    %191 = vmatprep.subr.mxu0 0.0
    %192 = vmatpush1.msra.mxu0 0.0
    %193 = vmatprep.subr.mxu0 0.0
    %194 = vmatpush1.msra.mxu0 0.0
    %195 = vmatprep.subr.mxu0 0.0
    %196 = vmatpush1.msra.mxu0 0.0
    %197 = vmatprep.subr.mxu0 0.0
    %198 = vmatpush1.msra.mxu0 0.0
    %199 = vmatprep.subr.mxu0 0.0
    %200 = vmatpush1.msra.mxu0 0.0
    %201 = vmatprep.mubr.f32.mxu0 0.0
    %202 = vmatmul.mubr.f32.gmra.mrb[0].mxu0 %v135
    %v203 = vpop.f32.mrb[0].mxu0
    %v204 = vadd.f32 %v131, %v203
    %v205 = vpop.f32.mrb[0].mxu0
    %206 = vdwg.mxu0
    %v207 = vtanh.pop %v204
    %v208 = vld [vmem:[%s5] sm:$0xff]
    %v209 = vld [vmem:[%s5 + $0x8] sm:$0xff]
    %v210 = vld [vmem:[%s5 + $0x10] sm:$0xff]
    %v211 = vld [vmem:[%s5 + $0x18] sm:$0xff]
    %v212 = vld [vmem:[%s6] sm:$0x1]
    %v214 = vlaneseq
    %v215 = vshrl.u32 %v214, 7
    %v216 = vsub.s32 0, %v215
    %v217 = vrot.slane %v212, %v216
    %v220 = vsel %vm133, %v207, 0
    %222 = vmatprep.subr.mxu0 0.0
    %223 = vmatpush1.msra.mxu0 %v208
    %224 = vmatprep.subr.mxu0 0.0
    %225 = vmatpush1.msra.mxu0 %v209
    %226 = vmatprep.subr.mxu0 0.0
    %227 = vmatpush1.msra.mxu0 %v210
    %228 = vmatprep.subr.mxu0 0.0
    %229 = vmatpush1.msra.mxu0 %v211
    %230 = vmatprep.subr.mxu0 0.0
    %231 = vmatpush1.msra.mxu0 0.0
    %232 = vmatprep.subr.mxu0 0.0
    %233 = vmatpush1.msra.mxu0 0.0
    %234 = vmatprep.subr.mxu0 0.0
    %235 = vmatpush1.msra.mxu0 0.0
    %236 = vmatprep.subr.mxu0 0.0
    %237 = vmatpush1.msra.mxu0 0.0
    %238 = vmatprep.subr.mxu0 0.0
    %239 = vmatpush1.msra.mxu0 0.0
    %240 = vmatprep.subr.mxu0 0.0
    %241 = vmatpush1.msra.mxu0 0.0
    %242 = vmatprep.subr.mxu0 0.0
    %243 = vmatpush1.msra.mxu0 0.0
    %244 = vmatprep.subr.mxu0 0.0
    %245 = vmatpush1.msra.mxu0 0.0
    %246 = vmatprep.subr.mxu0 0.0
    %247 = vmatpush1.msra.mxu0 0.0
    %248 = vmatprep.subr.mxu0 0.0
    %249 = vmatpush1.msra.mxu0 0.0
    %250 = vmatprep.subr.mxu0 0.0
    %251 = vmatpush1.msra.mxu0 0.0
    %252 = vmatprep.subr.mxu0 0.0
    %253 = vmatpush1.msra.mxu0 0.0
    %254 = vmatprep.subr.mxu0 0.0
    %255 = vmatpush1.msra.mxu0 0.0
    %256 = vmatprep.subr.mxu0 0.0
    %257 = vmatpush1.msra.mxu0 0.0
    %258 = vmatprep.subr.mxu0 0.0
    %259 = vmatpush1.msra.mxu0 0.0
    %260 = vmatprep.subr.mxu0 0.0
    %261 = vmatpush1.msra.mxu0 0.0
    %262 = vmatprep.subr.mxu0 0.0
    %263 = vmatpush1.msra.mxu0 0.0
    %264 = vmatprep.subr.mxu0 0.0
    %265 = vmatpush1.msra.mxu0 0.0
    %266 = vmatprep.subr.mxu0 0.0
    %267 = vmatpush1.msra.mxu0 0.0
    %268 = vmatprep.subr.mxu0 0.0
    %269 = vmatpush1.msra.mxu0 0.0
    %270 = vmatprep.subr.mxu0 0.0
    %271 = vmatpush1.msra.mxu0 0.0
    %272 = vmatprep.subr.mxu0 0.0
    %273 = vmatpush1.msra.mxu0 0.0
    %274 = vmatprep.subr.mxu0 0.0
    %275 = vmatpush1.msra.mxu0 0.0
    %276 = vmatprep.subr.mxu0 0.0
    %277 = vmatpush1.msra.mxu0 0.0
    %278 = vmatprep.subr.mxu0 0.0
    %279 = vmatpush1.msra.mxu0 0.0
    %280 = vmatprep.subr.mxu0 0.0
    %281 = vmatpush1.msra.mxu0 0.0
    %282 = vmatprep.subr.mxu0 0.0
    %283 = vmatpush1.msra.mxu0 0.0
    %284 = vmatprep.subr.mxu0 0.0
    %285 = vmatpush1.msra.mxu0 0.0
    %286 = vmatprep.mubr.f32.mxu0 0.0
    %287 = vmatmul.mubr.f32.gmra.mrb[0].mxu0 %v220
    %v288 = vpop.f32.mrb[0].mxu0
    %v289 = vadd.f32 %v217, %v288
    %v290 = vpop.f32.mrb[0].mxu0
    %291 = vdwg.mxu0
    %292 = vmax.xlane.f32.xlu0 %v289
    %v293 = vpop.xlane.xlu0 %292
    %v294 = vsub.f32 %v289, %v293
    %v295 = vmul.f32 %v294, 1.442695
    %v296 = vpow.pop %v295
    %297 = vadd.xlane.f32.xlu0 %v296
    %v298 = vpop.xlane.xlu0 %297
    %v299 = vrcp.pop %v298
    %v300 = vmul.f32 %v298, %v299
    %v301 = vsub.f32 2.0, %v300
    %v302 = vmul.f32 %v299, %v301
    %v303 = vmul.f32 %v296, %v302
    %304 = vst [vmem:[#allocation2] sm:$0xff] %v289
    %s305 = scalar_lea.vmem [#allocation2], 8
    %306 = vst [vmem:[%s305] sm:$0xff] %v303
    // Predicated region
    $region30: #{tpu_custom_call.1} parent=1 // pred_check
      _
    $region31: #{tpu_custom_call.1} parent=1 // pred_check_branch
      %308 = sbr.rel (0) target = $region33
    $region32: #{tpu_custom_call.1} parent=1 // pred_region
      %s310 = ssub.s32 256, 256
      %311 = vsyncadd [#allocation3], %s310
      %s312 = sshll.u32 [#allocation2], 4
      %s313 = int_to_ptr.vmem [resolvable:$true] %s312
      %318 = dma.vmem_to_hbm [thread:$0]  %s313, 256, %s7, [#allocation3], 128, 128, 8
    $region33: #{tpu_custom_call.1} parent=1 // pred_fallthru
      _
    // Predicated region
    $region34: #{tpu_custom_call.1} parent=1 // pred_check
      _
    $region35: #{tpu_custom_call.1} parent=1 // pred_check_branch
      %320 = sbr.rel (0) target = $region37
    $region36: #{tpu_custom_call.1} parent=1 // pred_region
      %321 = dma.done [#allocation3], 256
    $region37: #{tpu_custom_call.1} parent=1 // pred_fallthru
      _
    %322 = vsyncpa [#allocation3], 1

</llo_original>
